<compile_context>
chip_gen: v7x
topology: tpu7x:2x2x1
jax: 0.10.0
libtpu: 0.0.40
codegen_flags: <defaults>
</compile_context>

<pallas_src>
import functools
import math

import jax
import jax.numpy as jnp
from jax.experimental import pallas as pl
from jax.experimental.pallas import tpu as pltpu


def _round_up(a, b):
    return ((a + b - 1) // b) * b


def _vmem_capacity_bytes():
    try:
        return int(pltpu.get_tpu_info().vmem_capacity_bytes)
    except Exception:
        return None


def _rows_kernel(x_ref, o_ref, *, eps):
    # Per-row layer norm; the hidden axis is the (lane-dense) last block dim.
    # Strictly per-row: partial boundary blocks may contain garbage rows,
    # which are discarded by the masked writeback — do not add cross-row ops.
    x = x_ref[...].astype(jnp.float32)
    mean = jnp.mean(x, axis=-1, keepdims=True)
    centered = x - mean
    var = jnp.mean(centered * centered, axis=-1, keepdims=True)
    denom = jnp.sqrt(var) + eps               # matches (std + eps), unbiased=False
    o_ref[...] = (centered / denom).astype(o_ref.dtype)


def _packed_kernel(x_ref, o_ref, *, eps, hidden, pack):
    # `pack` logical rows of width `hidden` are folded contiguously into each
    # 128-lane row, so HBM loads/stores stay full 128-lane.  Each group writes
    # directly into its o_ref lane slice (no concat, minimal f32 temporaries).
    for g in range(pack):                      # small static unroll (pack<=128)
        sl = slice(g * hidden, (g + 1) * hidden)
        c = x_ref[:, sl].astype(jnp.float32)
        mean = jnp.mean(c, axis=-1, keepdims=True)
        centered = c - mean
        var = jnp.mean(centered * centered, axis=-1, keepdims=True)
        denom = jnp.sqrt(var) + eps
        o_ref[:, sl] = (centered / denom).astype(o_ref.dtype)


def my_layer_norm(x, eps=1e-6, target_block_bytes=None, min_grid_steps=8):
    """(x - mean) / (std + eps) over the last axis (std unbiased=False)."""
    orig_shape = x.shape
    hidden = orig_shape[-1]
    rows = int(math.prod(orig_shape[:-1]))

    itemsize = jnp.dtype(x.dtype).itemsize
    sublane = {4: 8, 2: 16, 1: 32}.get(itemsize, 8)

    # Generation-aware sizing: 128 MiB VMEM parts (v5e/v6e) get bigger blocks
    # and a higher scoped limit; 64 MiB parts (v7x) or unknown stay conservative.
    vmem_cap = _vmem_capacity_bytes()
    if vmem_cap is not None and vmem_cap >= (100 << 20):
        vmem_limit = 96 << 20
        if target_block_bytes is None:
            target_block_bytes = 8 << 20
    else:
        vmem_limit = 40 << 20
        if target_block_bytes is None:
            target_block_bytes = 2 << 20

    # Lane-dense packing for small hidden dims (e.g. hidden=32 -> pack=4);
    # pad rows up to a multiple of pack (zero rows normalize to 0, no NaN).
    pack = 1
    if hidden < 128 and 128 % hidden == 0:
        pack = 128 // hidden
    x2 = x.reshape(rows, hidden)
    pad_rows = (-rows) % pack
    if pad_rows:
        x2 = jnp.pad(x2, ((0, pad_rows), (0, 0)))
    rows_p = rows + pad_rows
    rows2 = rows_p // pack
    lanes = hidden * pack
    x2d = x2.reshape(rows2, lanes)             # contiguous reshape: free

    # Block size: as close to target_block_bytes as possible, but capped so the
    # grid has >= min_grid_steps steps (pipelining + v7x megacore sharding).
    # TODO(synk): for very large hidden (row_bytes >> target) the sublane-row
    # floor can still exceed the VMEM budget; that case needs a second grid
    # axis over hidden with a two-pass (sum/sumsq then normalize) reduction.
    row_bytes = lanes * itemsize
    target_rows = max(1, target_block_bytes // row_bytes)
    rows_from_target = max(sublane, (target_rows // sublane) * sublane)
    cap = _round_up(max(1, -(-rows2 // min_grid_steps)), sublane)
    block_rows = min(rows_from_target, cap)
    if block_rows >= rows2:
        block_rows = rows2                     # tiny input: one full block
    grid_rows = pl.cdiv(rows2, block_rows)

    if pack > 1:
        kernel = functools.partial(_packed_kernel, eps=eps, hidden=hidden,
                                   pack=pack)
    else:
        kernel = functools.partial(_rows_kernel, eps=eps)

    out = pl.pallas_call(
        kernel,
        out_shape=jax.ShapeDtypeStruct((rows2, lanes), x.dtype),
        grid_spec=pltpu.PrefetchScalarGridSpec(
            num_scalar_prefetch=0,
            grid=(grid_rows,),
            in_specs=[pl.BlockSpec((block_rows, lanes), lambda i: (i, 0))],
            out_specs=pl.BlockSpec((block_rows, lanes), lambda i: (i, 0)),
        ),
        compiler_params=pltpu.CompilerParams(
            dimension_semantics=("parallel",),   # shards across v7x's 2 TCs
            vmem_limit_bytes=vmem_limit,
        ),
    )(x2d)

    if pad_rows:
        return out.reshape(rows_p, hidden)[:rows].reshape(orig_shape)
    return out.reshape(orig_shape)


def _reference(x, eps=1e-6):
    xf = x.astype(jnp.float32)
    mean = jnp.mean(xf, axis=-1, keepdims=True)
    std = jnp.sqrt(jnp.mean((xf - mean) ** 2, axis=-1, keepdims=True))
    return ((xf - mean) / (std + eps)).astype(x.dtype)


if __name__ == "__main__":
    key = jax.random.PRNGKey(0)
    eps = 1e-6

    # Module-consistent shapes: batch=2, seq=8, hidden=32 (features=32).
    batch, seq, hidden = 2, 8, 32
    # gamma/beta from __init__ are dead code in the early-return forward;
    # kept only for parity with the module.
    gamma = jnp.ones((hidden,), jnp.float32)
    beta = jnp.zeros((hidden,), jnp.float32)

    k1, k2, k3 = jax.random.split(key, 3)

    # 1) small-hidden (lane-packed) path, f32.
    x_small = jax.random.normal(k1, (batch, seq, hidden), dtype=jnp.float32)
    out_small = jax.block_until_ready(my_layer_norm(x_small, eps=eps))
    assert jnp.allclose(out_small, _reference(x_small, eps),
                        atol=1e-5, rtol=1e-5)

    # 2) plain per-row path (hidden multiple of 128), f32, multi-step grid.
    x_big = jax.random.normal(k2, (4, 8, 256), dtype=jnp.float32)
    out_big = jax.block_until_ready(my_layer_norm(x_big, eps=eps))
    assert jnp.allclose(out_big, _reference(x_big, eps),
                        atol=1e-5, rtol=1e-5)

    # 3) bf16 input: f32 compute in-kernel, bf16 out (dtype-aware sublanes).
    x_bf16 = jax.random.normal(k3, (4, 8, 256),
                               dtype=jnp.float32).astype(jnp.bfloat16)
    out_bf16 = jax.block_until_ready(my_layer_norm(x_bf16, eps=eps))
    assert jnp.allclose(out_bf16.astype(jnp.float32),
                        _reference(x_bf16, eps).astype(jnp.float32),
                        atol=3e-2, rtol=3e-2)

    print("KERNEL_OK")
</pallas_src>

<mosaic_0001>
module attributes {stable_mosaic.version = 11 : i64} {
  func.func @_packed_kernel(%arg0: i32, %arg1: memref<4x128xf32, #tpu.memory_space<vmem>>, %arg2: memref<4x128xf32, #tpu.memory_space<vmem>>) attributes {dimension_semantics = [#tpu.dimension_semantics<parallel>], iteration_bounds = array<i64: 1>, scalar_prefetch = 0 : i64, scratch_operands = 0 : i64, tpu.core_type = #tpu.core_type<tc>, window_params = [{transform_indices = @transform_0, window_bounds = array<i64: 4, 128>}, {transform_indices = @transform_1, window_bounds = array<i64: 4, 128>}]} {
    %c0 = arith.constant 0 : index
    %c0_0 = arith.constant 0 : index
    %0 = vector.load %arg1[%c0, %c0_0] : memref<4x128xf32, #tpu.memory_space<vmem>>, vector<4x32xf32>
    %cst = arith.constant dense<0.000000e+00> : vector<4xf32>
    %1 = vector.multi_reduction <add>, %0, %cst [1] : vector<4x32xf32> to vector<4xf32>
    %2 = vector.shape_cast %1 : vector<4xf32> to vector<4x1xf32>
    %cst_1 = arith.constant 3.200000e+01 : f32
    %3 = vector.broadcast %cst_1 : f32 to vector<4x1xf32>
    %4 = arith.divf %2, %3 : vector<4x1xf32>
    %5 = vector.broadcast %4 : vector<4x1xf32> to vector<4x32xf32>
    %6 = arith.subf %0, %5 : vector<4x32xf32>
    %7 = arith.mulf %6, %6 : vector<4x32xf32>
    %cst_2 = arith.constant dense<0.000000e+00> : vector<4xf32>
    %8 = vector.multi_reduction <add>, %7, %cst_2 [1] : vector<4x32xf32> to vector<4xf32>
    %9 = vector.shape_cast %8 : vector<4xf32> to vector<4x1xf32>
    %cst_3 = arith.constant 3.200000e+01 : f32
    %10 = vector.broadcast %cst_3 : f32 to vector<4x1xf32>
    %11 = arith.divf %9, %10 : vector<4x1xf32>
    %12 = math.sqrt %11 : vector<4x1xf32>
    %cst_4 = arith.constant 9.99999997E-7 : f32
    %13 = vector.broadcast %cst_4 : f32 to vector<4x1xf32>
    %14 = arith.addf %12, %13 : vector<4x1xf32>
    %15 = vector.broadcast %14 : vector<4x1xf32> to vector<4x32xf32>
    %16 = arith.divf %6, %15 : vector<4x32xf32>
    %c0_5 = arith.constant 0 : index
    %c0_6 = arith.constant 0 : index
    %17 = vector.load %arg2[%c0_5, %c0_6] : memref<4x128xf32, #tpu.memory_space<vmem>>, vector<4x32xf32>
    tpu.vector_store %arg2[%c0_5, %c0_6], %16 {strides = array<i32>} : memref<4x128xf32, #tpu.memory_space<vmem>>, vector<4x32xf32>,
    %c0_7 = arith.constant 0 : index
    %c32 = arith.constant 32 : index
    %18 = vector.load %arg1[%c0_7, %c32] : memref<4x128xf32, #tpu.memory_space<vmem>>, vector<4x32xf32>
    %cst_8 = arith.constant dense<0.000000e+00> : vector<4xf32>
    %19 = vector.multi_reduction <add>, %18, %cst_8 [1] : vector<4x32xf32> to vector<4xf32>
    %20 = vector.shape_cast %19 : vector<4xf32> to vector<4x1xf32>
    %cst_9 = arith.constant 3.200000e+01 : f32
    %21 = vector.broadcast %cst_9 : f32 to vector<4x1xf32>
    %22 = arith.divf %20, %21 : vector<4x1xf32>
    %23 = vector.broadcast %22 : vector<4x1xf32> to vector<4x32xf32>
    %24 = arith.subf %18, %23 : vector<4x32xf32>
    %25 = arith.mulf %24, %24 : vector<4x32xf32>
    %cst_10 = arith.constant dense<0.000000e+00> : vector<4xf32>
    %26 = vector.multi_reduction <add>, %25, %cst_10 [1] : vector<4x32xf32> to vector<4xf32>
    %27 = vector.shape_cast %26 : vector<4xf32> to vector<4x1xf32>
    %cst_11 = arith.constant 3.200000e+01 : f32
    %28 = vector.broadcast %cst_11 : f32 to vector<4x1xf32>
    %29 = arith.divf %27, %28 : vector<4x1xf32>
    %30 = math.sqrt %29 : vector<4x1xf32>
    %cst_12 = arith.constant 9.99999997E-7 : f32
    %31 = vector.broadcast %cst_12 : f32 to vector<4x1xf32>
    %32 = arith.addf %30, %31 : vector<4x1xf32>
    %33 = vector.broadcast %32 : vector<4x1xf32> to vector<4x32xf32>
    %34 = arith.divf %24, %33 : vector<4x32xf32>
    %c0_13 = arith.constant 0 : index
    %c32_14 = arith.constant 32 : index
    %35 = vector.load %arg2[%c0_13, %c32_14] : memref<4x128xf32, #tpu.memory_space<vmem>>, vector<4x32xf32>
    tpu.vector_store %arg2[%c0_13, %c32_14], %34 {strides = array<i32>} : memref<4x128xf32, #tpu.memory_space<vmem>>, vector<4x32xf32>,
    %c0_15 = arith.constant 0 : index
    %c64 = arith.constant 64 : index
    %36 = vector.load %arg1[%c0_15, %c64] : memref<4x128xf32, #tpu.memory_space<vmem>>, vector<4x32xf32>
    %cst_16 = arith.constant dense<0.000000e+00> : vector<4xf32>
    %37 = vector.multi_reduction <add>, %36, %cst_16 [1] : vector<4x32xf32> to vector<4xf32>
    %38 = vector.shape_cast %37 : vector<4xf32> to vector<4x1xf32>
    %cst_17 = arith.constant 3.200000e+01 : f32
    %39 = vector.broadcast %cst_17 : f32 to vector<4x1xf32>
    %40 = arith.divf %38, %39 : vector<4x1xf32>
    %41 = vector.broadcast %40 : vector<4x1xf32> to vector<4x32xf32>
    %42 = arith.subf %36, %41 : vector<4x32xf32>
    %43 = arith.mulf %42, %42 : vector<4x32xf32>
    %cst_18 = arith.constant dense<0.000000e+00> : vector<4xf32>
    %44 = vector.multi_reduction <add>, %43, %cst_18 [1] : vector<4x32xf32> to vector<4xf32>
    %45 = vector.shape_cast %44 : vector<4xf32> to vector<4x1xf32>
    %cst_19 = arith.constant 3.200000e+01 : f32
    %46 = vector.broadcast %cst_19 : f32 to vector<4x1xf32>
    %47 = arith.divf %45, %46 : vector<4x1xf32>
    %48 = math.sqrt %47 : vector<4x1xf32>
    %cst_20 = arith.constant 9.99999997E-7 : f32
    %49 = vector.broadcast %cst_20 : f32 to vector<4x1xf32>
    %50 = arith.addf %48, %49 : vector<4x1xf32>
    %51 = vector.broadcast %50 : vector<4x1xf32> to vector<4x32xf32>
    %52 = arith.divf %42, %51 : vector<4x32xf32>
    %c0_21 = arith.constant 0 : index
    %c64_22 = arith.constant 64 : index
    %53 = vector.load %arg2[%c0_21, %c64_22] : memref<4x128xf32, #tpu.memory_space<vmem>>, vector<4x32xf32>
    tpu.vector_store %arg2[%c0_21, %c64_22], %52 {strides = array<i32>} : memref<4x128xf32, #tpu.memory_space<vmem>>, vector<4x32xf32>,
    %c0_23 = arith.constant 0 : index
    %c96 = arith.constant 96 : index
    %54 = vector.load %arg1[%c0_23, %c96] : memref<4x128xf32, #tpu.memory_space<vmem>>, vector<4x32xf32>
    %cst_24 = arith.constant dense<0.000000e+00> : vector<4xf32>
    %55 = vector.multi_reduction <add>, %54, %cst_24 [1] : vector<4x32xf32> to vector<4xf32>
    %56 = vector.shape_cast %55 : vector<4xf32> to vector<4x1xf32>
    %cst_25 = arith.constant 3.200000e+01 : f32
    %57 = vector.broadcast %cst_25 : f32 to vector<4x1xf32>
    %58 = arith.divf %56, %57 : vector<4x1xf32>
    %59 = vector.broadcast %58 : vector<4x1xf32> to vector<4x32xf32>
    %60 = arith.subf %54, %59 : vector<4x32xf32>
    %61 = arith.mulf %60, %60 : vector<4x32xf32>
    %cst_26 = arith.constant dense<0.000000e+00> : vector<4xf32>
    %62 = vector.multi_reduction <add>, %61, %cst_26 [1] : vector<4x32xf32> to vector<4xf32>
    %63 = vector.shape_cast %62 : vector<4xf32> to vector<4x1xf32>
    %cst_27 = arith.constant 3.200000e+01 : f32
    %64 = vector.broadcast %cst_27 : f32 to vector<4x1xf32>
    %65 = arith.divf %63, %64 : vector<4x1xf32>
    %66 = math.sqrt %65 : vector<4x1xf32>
    %cst_28 = arith.constant 9.99999997E-7 : f32
    %67 = vector.broadcast %cst_28 : f32 to vector<4x1xf32>
    %68 = arith.addf %66, %67 : vector<4x1xf32>
    %69 = vector.broadcast %68 : vector<4x1xf32> to vector<4x32xf32>
    %70 = arith.divf %60, %69 : vector<4x32xf32>
    %c0_29 = arith.constant 0 : index
    %c96_30 = arith.constant 96 : index
    %71 = vector.load %arg2[%c0_29, %c96_30] : memref<4x128xf32, #tpu.memory_space<vmem>>, vector<4x32xf32>
    tpu.vector_store %arg2[%c0_29, %c96_30], %70 {strides = array<i32>} : memref<4x128xf32, #tpu.memory_space<vmem>>, vector<4x32xf32>,
    return
  }
  func.func @transform_0(%arg0: i32) -> (i32, i32) {
    %c0_i32 = arith.constant 0 : i32
    %c0_i32_0 = arith.constant 0 : i32
    return %arg0, %c0_i32 : i32, i32
  }
  func.func @transform_1(%arg0: i32) -> (i32, i32) {
    %c0_i32 = arith.constant 0 : i32
    %c0_i32_0 = arith.constant 0 : i32
    return %arg0, %c0_i32 : i32, i32
  }
}

</mosaic_0001>

<llo_original>
// kernel: tpu_custom_call.1
$region0: #{tpu_custom_call.1}
  #allocation0 [shape = 'u32[]', space=smem, size = 0x4, offset = 0x4, fixed_abs, tag = 'smem constant byte address 0x4 - core index']
  #allocation1 [shape = 'u32[144,128]{1,0:T(1,128)}', space=vmem, size = 0x12000, scoped, tag = 'internal scratch']
  %s0 = inlined_call_operand.hbm [shape: f32[4,128], index: 0, kind: input, shape index: {}]
  %s1 = inlined_call_operand.hbm [shape: f32[4,128], index: 1, kind: output, shape index: {}]
  %s2 = sld [smem:[#allocation0]]
  $region18: #{tpu_custom_call.1} parent=0
    _
  %s4 = ssub.s32 1, %s2
  %s5 = scalar_select 0, %s4, %s2
  $region1: #{tpu_custom_call.1} parent=0
    #allocation2 [shape = 'u8[2048]{0}', space=vmem, size = 0x800, scoped, tag = 'input window, operand 0, single buffered']
    #allocation3 [shape = 's32[1]{0}', space=sflag, size = 0x4, scoped, tag = 'scoped memory for tpu_custom_call.1']
    #allocation4 [shape = 's32[1]{0}', space=sflag, size = 0x4, scoped, tag = 'scoped memory for tpu_custom_call.1']
    #allocation5 [shape = 'u8[2048]{0}', space=vmem, size = 0x800, scoped, tag = 'output window, operand 0, single buffered']
    %6 = vsyncpa [#allocation3], 0
    %7 = vsyncpa [#allocation4], 0
    // Predicated region
    $region2: #{tpu_custom_call.1} parent=1 // pred_check
      _
    $region3: #{tpu_custom_call.1} parent=1 // pred_check_branch
      %9 = sbr.rel (0) target = $region5
    $region4: #{tpu_custom_call.1} parent=1 // pred_region
      %s11 = ssub.s32 64, 64
      %12 = vsyncadd [#allocation3], %s11
      %s14 = sshll.u32 [#allocation2], 4
      %s15 = int_to_ptr.vmem [resolvable:$true] %s14
      %17 = dma.hbm_to_vmem [thread:$0]  %s0, 64, %s15, [#allocation3]
    $region5: #{tpu_custom_call.1} parent=1 // pred_fallthru
      _
    // Predicated region
    $region6: #{tpu_custom_call.1} parent=1 // pred_check
      _
    $region7: #{tpu_custom_call.1} parent=1 // pred_check_branch
      %19 = sbr.rel (0) target = $region9
    $region8: #{tpu_custom_call.1} parent=1 // pred_region
      %20 = dma.done [#allocation3], 64
    $region9: #{tpu_custom_call.1} parent=1 // pred_fallthru
      _
    %v21 = vld [vmem:[#allocation2] sm:$0xf]
    %vm22 = vcmask 257024
    %v23 = vsel %vm22, %v21, 0.0
    %24 = vadd.xlane.f32.xlu0 %v23
    %v25 = vpop.xlane.xlu0 %24
    %v26 = vrcp.pop 32.0
    %v27 = vmul.f32 %v25, %v26
    %v28 = vsub.f32 %v21, %v27
    %v29 = vmul.f32 %v28, %v28
    %v30 = vsel %vm22, %v29, 0.0
    %31 = vadd.xlane.f32.xlu0 %v30
    %v32 = vpop.xlane.xlu0 %31
    %v33 = vmul.f32 %v32, %v26
    %v34 = vrsqrt.pop %v33
    %v35 = vmul.f32 %v33, %v34
    %vm36 = vcmp.eq.f32.partialorder %v33, inf
    %v37 = vsel %vm36, %v33, %v35
    %vm38 = vcmp.eq.f32.partialorder %v33, 0.0
    %v39 = vand.u32 %v33, 2147483648
    %v40 = vsel %vm38, %v39, %v37
    %v41 = vadd.f32 %v40, 1e-06
    %v42 = vrcp.pop %v41
    %v43 = vmul.f32 %v28, %v42
    %44 = vst.msk [vmem:[#allocation5] sm:$0xf] %vm22, %v43
    %v45 = vld [vmem:[#allocation2] sm:$0xf]
    %47 = vrot.lane.b32.xlu0 %v45, 96
    %v48 = vpop.permute.xlu0 %47
    %v50 = vsel %vm22, %v48, 0.0
    %51 = vadd.xlane.f32.xlu0 %v50
    %v52 = vpop.xlane.xlu0 %51
    %v53 = vmul.f32 %v52, %v26
    %v54 = vsub.f32 %v45, %v53
    %v55 = vmul.f32 %v54, %v54
    %57 = vrot.lane.b32.xlu0 %v55, 96
    %v58 = vpop.permute.xlu0 %57
    %v60 = vsel %vm22, %v58, 0.0
    %61 = vadd.xlane.f32.xlu0 %v60
    %v62 = vpop.xlane.xlu0 %61
    %v63 = vmul.f32 %v62, %v26
    %v64 = vrsqrt.pop %v63
    %v65 = vmul.f32 %v63, %v64
    %vm66 = vcmp.eq.f32.partialorder %v63, inf
    %v67 = vsel %vm66, %v63, %v65
    %vm68 = vcmp.eq.f32.partialorder %v63, 0.0
    %v69 = vand.u32 %v63, 2147483648
    %v70 = vsel %vm68, %v69, %v67
    %v71 = vadd.f32 %v70, 1e-06
    %v72 = vrcp.pop %v71
    %v73 = vmul.f32 %v54, %v72
    %vm74 = vcmask 519424
    %75 = vst.msk [vmem:[#allocation5] sm:$0xf] %vm74, %v73
    %v76 = vld [vmem:[#allocation2] sm:$0xf]
    %78 = vrot.lane.b32.xlu0 %v76, 64
    %v79 = vpop.permute.xlu0 %78
    %v81 = vsel %vm22, %v79, 0.0
    %82 = vadd.xlane.f32.xlu0 %v81
    %v83 = vpop.xlane.xlu0 %82
    %v84 = vmul.f32 %v83, %v26
    %v85 = vsub.f32 %v76, %v84
    %v86 = vmul.f32 %v85, %v85
    %88 = vrot.lane.b32.xlu0 %v86, 64
    %v89 = vpop.permute.xlu0 %88
    %v91 = vsel %vm22, %v89, 0.0
    %92 = vadd.xlane.f32.xlu0 %v91
    %v93 = vpop.xlane.xlu0 %92
    %v94 = vmul.f32 %v93, %v26
    %v95 = vrsqrt.pop %v94
    %v96 = vmul.f32 %v94, %v95
    %vm97 = vcmp.eq.f32.partialorder %v94, inf
    %v98 = vsel %vm97, %v94, %v96
    %vm99 = vcmp.eq.f32.partialorder %v94, 0.0
    %v100 = vand.u32 %v94, 2147483648
    %v101 = vsel %vm99, %v100, %v98
    %v102 = vadd.f32 %v101, 1e-06
    %v103 = vrcp.pop %v102
    %v104 = vmul.f32 %v85, %v103
    %vm105 = vcmask 781824
    %106 = vst.msk [vmem:[#allocation5] sm:$0xf] %vm105, %v104
    %v107 = vld [vmem:[#allocation2] sm:$0xf]
    %109 = vrot.lane.b32.xlu0 %v107, 32
    %v110 = vpop.permute.xlu0 %109
    %v112 = vsel %vm22, %v110, 0.0
    %113 = vadd.xlane.f32.xlu0 %v112
    %v114 = vpop.xlane.xlu0 %113
    %v115 = vmul.f32 %v114, %v26
    %v116 = vsub.f32 %v107, %v115
    %v117 = vmul.f32 %v116, %v116
    %119 = vrot.lane.b32.xlu0 %v117, 32
    %v120 = vpop.permute.xlu0 %119
    %v122 = vsel %vm22, %v120, 0.0
    %123 = vadd.xlane.f32.xlu0 %v122
    %v124 = vpop.xlane.xlu0 %123
    %v125 = vmul.f32 %v124, %v26
    %v126 = vrsqrt.pop %v125
    %v127 = vmul.f32 %v125, %v126
    %vm128 = vcmp.eq.f32.partialorder %v125, inf
    %v129 = vsel %vm128, %v125, %v127
    %vm130 = vcmp.eq.f32.partialorder %v125, 0.0
    %v131 = vand.u32 %v125, 2147483648
    %v132 = vsel %vm130, %v131, %v129
    %v133 = vadd.f32 %v132, 1e-06
    %v134 = vrcp.pop %v133
    %v135 = vmul.f32 %v116, %v134
    %vm136 = vcmask 1044224
    %137 = vst.msk [vmem:[#allocation5] sm:$0xf] %vm136, %v135
    // Predicated region
    $region10: #{tpu_custom_call.1} parent=1 // pred_check
      _
    $region11: #{tpu_custom_call.1} parent=1 // pred_check_branch
      %139 = sbr.rel (0) target = $region13
    $region12: #{tpu_custom_call.1} parent=1 // pred_region
      %s141 = ssub.s32 64, 64
      %142 = vsyncadd [#allocation4], %s141
      %s144 = sshll.u32 [#allocation5], 4
      %s145 = int_to_ptr.vmem [resolvable:$true] %s144
      %147 = dma.vmem_to_hbm [thread:$0]  %s145, 64, %s1, [#allocation4]
    $region13: #{tpu_custom_call.1} parent=1 // pred_fallthru
      _
    // Predicated region
    $region14: #{tpu_custom_call.1} parent=1 // pred_check
      _
    $region15: #{tpu_custom_call.1} parent=1 // pred_check_branch
      %149 = sbr.rel (0) target = $region17
    $region16: #{tpu_custom_call.1} parent=1 // pred_region
      %150 = dma.done [#allocation4], 64
    $region17: #{tpu_custom_call.1} parent=1 // pred_fallthru
      _
    %151 = vsyncpa [#allocation3], 1
    %152 = vsyncpa [#allocation4], 1

</llo_original>
